<compile_context>
chip_gen: v5e
topology: v5e:2x2
jax: 0.10.0
libtpu: 0.0.40
codegen_flags: <defaults>
</compile_context>

<pallas_src>
import functools
import math

import jax
import jax.numpy as jnp
from jax.experimental import pallas as pl
from jax.experimental.pallas import tpu as pltpu


def _layer_norm(x, gamma, beta, eps=1e-5):
    # PyTorch nn.LayerNorm: biased variance, eps inside the rsqrt.
    mean = jnp.mean(x, axis=-1, keepdims=True)
    var = jnp.mean((x - mean) ** 2, axis=-1, keepdims=True)
    return (x - mean) * jax.lax.rsqrt(var + eps) * gamma + beta


def encoder_layer_kernel(heads, seq_len,
                         x_ref,
                         g1_ref, be1_ref,
                         wqkv_ref, wo_ref, bo_ref,
                         g2_ref, be2_ref,
                         w1_ref, b1_ref, w2_ref, b2_ref,
                         o_ref):
    """One grid step processes a batch block: x_ref is (N, D), N = Bb * seq_len."""
    f32 = jnp.float32
    bf16 = jnp.bfloat16

    x = x_ref[...]                                  # (N, D) f32
    N, D = x.shape
    B = N // seq_len
    H = heads
    dk = D // H

    # ---- LayerNorm 1 (f32 elementwise math) ----
    xn = _layer_norm(x, g1_ref[...], be1_ref[...])
    xnb = xn.astype(bf16)

    # ---- Q/K/V projection straight into head-major layout ----
    # wqkv_ref is (3H, D, dk) bf16 (1/sqrt(dk) already folded into the Wq slice).
    # One batched contraction; no per-head lane slicing / concatenation in-kernel.
    xb = jnp.broadcast_to(xnb, (3 * H, N, D))       # cheap leading-dim replication
    qkv = jnp.einsum('gnd,gde->gne', xb, wqkv_ref[...],
                     preferred_element_type=f32)    # (3H, N, dk) f32

    # (H, N, dk) -> (H*B, S, dk): pure leading/sublane-tile-aligned reshape (free).
    qh = qkv[0 * H:1 * H].reshape(H * B, seq_len, dk).astype(bf16)
    kh = qkv[1 * H:2 * H].reshape(H * B, seq_len, dk).astype(bf16)
    vh = qkv[2 * H:3 * H].reshape(H * B, seq_len, dk).astype(bf16)

    # ---- batched attention: one einsum + one softmax for all (head, batch) pairs ----
    scores = jnp.einsum('nqe,nke->nqk', qh, kh,
                        preferred_element_type=f32)              # (H*B, S, S) f32
    scores = scores - jnp.max(scores, axis=-1, keepdims=True)
    p = jnp.exp(scores)
    p = p * pl.reciprocal(jnp.sum(p, axis=-1, keepdims=True), approx=True)
    ctx = jnp.einsum('nqk,nke->nqe', p.astype(bf16), vh,
                     preferred_element_type=f32)                 # (H*B, S, dk) f32

    # ---- head merge folded into Wo ----
    # wo_ref is (H, dk, D) bf16: one batched contraction + leading-axis sum
    # (no per-head weight slices; the transpose+concat of the PyTorch reference
    # is absorbed into the contraction).
    ctxh = ctx.reshape(H, N, dk).astype(bf16)
    attn_h = jnp.einsum('hne,hed->hnd', ctxh, wo_ref[...],
                        preferred_element_type=f32)              # (H, N, D)
    attn = jnp.sum(attn_h, axis=0) + bo_ref[...]

    # residual 1 (dropout = identity)
    x = x + attn

    # ---- LayerNorm 2 + FeedForward ----
    xn2 = _layer_norm(x, g2_ref[...], be2_ref[...])
    h1 = jnp.dot(xn2.astype(bf16), w1_ref[...],
                 preferred_element_type=f32) + b1_ref[...]
    h1 = jnp.maximum(h1, 0.0)                       # ReLU (intended by the reference)
    ff = jnp.dot(h1.astype(bf16), w2_ref[...],
                 preferred_element_type=f32) + b2_ref[...]

    # residual 2 (dropout = identity)
    o_ref[...] = (x + ff).astype(o_ref.dtype)


def encoder_layer(x, params, heads, *, grid_blocks=1):
    """grid_blocks=1 (default) is right at toy sizes / single-TC chips (v5e/v6e);
    grid_blocks=2 gives each v7x TensorCore one batch block."""
    B, S, D = x.shape
    H = heads
    dk = D // H
    Hff = params["w1"].shape[1]
    assert B % grid_blocks == 0
    N = B * S
    Nb = (B // grid_blocks) * S

    bf16 = jnp.bfloat16
    scale = 1.0 / math.sqrt(dk)

    # ---- one-time wrapper-side (plain XLA) parameter transforms ----
    # PyTorch view(size, -1, heads, dk) splits output features head-major, so
    # (D_in, D_out) -> (D_in, H, dk) -> (H, D_in, dk). 1/sqrt(dk) folded into Wq.
    def heads_major(w):
        return jnp.transpose(w.reshape(D, H, dk), (1, 0, 2))

    wq_r = heads_major(params["wq"] * scale).astype(bf16)
    wk_r = heads_major(params["wk"]).astype(bf16)
    wv_r = heads_major(params["wv"]).astype(bf16)
    wqkv = jnp.concatenate([wq_r, wk_r, wv_r], axis=0)           # (3H, D, dk) bf16
    wo_r = params["wo"].reshape(H, dk, D).astype(bf16)           # (H, dk, D) bf16
    w1 = params["w1"].astype(bf16)
    w2 = params["w2"].astype(bf16)

    # Fold batch*seq into the matmul M dimension wrapper-side (free XLA reshape).
    x2 = x.reshape(N, D)

    kernel = functools.partial(encoder_layer_kernel, heads, S)

    def rep(shape):
        # Replicated block: same (full-array) block every grid step.
        return pl.BlockSpec(shape, lambda i, _r=len(shape): (0,) * _r)

    out = pl.pallas_call(
        kernel,
        out_shape=jax.ShapeDtypeStruct((N, D), x.dtype),
        grid=(grid_blocks,),
        in_specs=[
            pl.BlockSpec((Nb, D), lambda i: (i, 0)),   # x rows for this batch block
            rep((1, D)), rep((1, D)),                  # LN1 gamma/beta
            rep((3 * H, D, dk)),                       # stacked head-major Wq/Wk/Wv
            rep((H, dk, D)),                           # head-split Wo
            rep((1, D)),                               # bo
            rep((1, D)), rep((1, D)),                  # LN2 gamma/beta
            rep((D, Hff)), rep((1, Hff)),              # FF layer1 W/b
            rep((Hff, D)), rep((1, D)),                # FF layer2 W/b
        ],
        out_specs=pl.BlockSpec((Nb, D), lambda i: (i, 0)),
        compiler_params=pltpu.CompilerParams(
            dimension_semantics=("parallel",),
            vmem_limit_bytes=32 * 1024 * 1024,         # raise v5e's 16 MiB scoped default
        ),
    )(x2,
      params["ln1_g"], params["ln1_b"],
      wqkv, wo_r, params["bo"],
      params["ln2_g"], params["ln2_b"],
      w1, params["b1"], w2, params["b2"])
    return out.reshape(B, S, D)


def init_params(key, D, Hff):
    """Deterministic synthetic parameters. Linear weights stored already transposed
    so that y = x @ W (+ b), matching PyTorch's y = x @ weight.T + bias.
    (Q/K/V Linears have bias=False in the reference; Wo and FFN Linears have bias.)"""
    ks = jax.random.split(key, 8)
    s = 0.02
    return {
        "ln1_g": jnp.ones((1, D), jnp.float32),
        "ln1_b": jnp.zeros((1, D), jnp.float32),
        "wq": s * jax.random.normal(ks[0], (D, D), jnp.float32),
        "wk": s * jax.random.normal(ks[1], (D, D), jnp.float32),
        "wv": s * jax.random.normal(ks[2], (D, D), jnp.float32),
        "wo": s * jax.random.normal(ks[3], (D, D), jnp.float32),
        "bo": s * jax.random.normal(ks[4], (1, D), jnp.float32),
        "ln2_g": jnp.ones((1, D), jnp.float32),
        "ln2_b": jnp.zeros((1, D), jnp.float32),
        "w1": s * jax.random.normal(ks[5], (D, Hff), jnp.float32),
        "b1": jnp.zeros((1, Hff), jnp.float32),
        "w2": s * jax.random.normal(ks[6], (Hff, D), jnp.float32),
        "b2": jnp.zeros((1, D), jnp.float32),
    }


if __name__ == "__main__":
    B, S, D, heads, Hff = 2, 8, 32, 4, 64   # input_dims=32, heads=4, hidden_layers=64
    key = jax.random.PRNGKey(0)
    kx, kp = jax.random.split(key)
    x = jax.random.normal(kx, (B, S, D), jnp.float32)
    params = init_params(kp, D, Hff)

    out = encoder_layer(x, params, heads)           # single grid step at toy size
    out = jax.block_until_ready(out)
    assert out.shape == (B, S, D)
    print("KERNEL_OK")
</pallas_src>

<mosaic_0001>
module attributes {stable_mosaic.version = 11 : i64} {
  func.func @encoder_layer_kernel(%arg0: i32, %arg1: memref<16x32xf32, #tpu.memory_space<vmem>>, %arg2: memref<1x32xf32, #tpu.memory_space<vmem>>, %arg3: memref<1x32xf32, #tpu.memory_space<vmem>>, %arg4: memref<12x32x8xbf16, #tpu.memory_space<vmem>>, %arg5: memref<4x8x32xbf16, #tpu.memory_space<vmem>>, %arg6: memref<1x32xf32, #tpu.memory_space<vmem>>, %arg7: memref<1x32xf32, #tpu.memory_space<vmem>>, %arg8: memref<1x32xf32, #tpu.memory_space<vmem>>, %arg9: memref<32x64xbf16, #tpu.memory_space<vmem>>, %arg10: memref<1x64xf32, #tpu.memory_space<vmem>>, %arg11: memref<64x32xbf16, #tpu.memory_space<vmem>>, %arg12: memref<1x32xf32, #tpu.memory_space<vmem>>, %arg13: memref<16x32xf32, #tpu.memory_space<vmem>>) attributes {dimension_semantics = [#tpu.dimension_semantics<parallel>], iteration_bounds = array<i64: 1>, scalar_prefetch = 0 : i64, scratch_operands = 0 : i64, tpu.core_type = #tpu.core_type<tc>, window_params = [{transform_indices = @transform_0, window_bounds = array<i64: 16, 32>}, {pipeline_mode = #tpu.pipeline_mode<synchronous>, transform_indices = @transform_1, window_bounds = array<i64: 1, 32>}, {pipeline_mode = #tpu.pipeline_mode<synchronous>, transform_indices = @transform_2, window_bounds = array<i64: 1, 32>}, {pipeline_mode = #tpu.pipeline_mode<synchronous>, transform_indices = @transform_3, window_bounds = array<i64: 12, 32, 8>}, {pipeline_mode = #tpu.pipeline_mode<synchronous>, transform_indices = @transform_4, window_bounds = array<i64: 4, 8, 32>}, {pipeline_mode = #tpu.pipeline_mode<synchronous>, transform_indices = @transform_5, window_bounds = array<i64: 1, 32>}, {pipeline_mode = #tpu.pipeline_mode<synchronous>, transform_indices = @transform_6, window_bounds = array<i64: 1, 32>}, {pipeline_mode = #tpu.pipeline_mode<synchronous>, transform_indices = @transform_7, window_bounds = array<i64: 1, 32>}, {pipeline_mode = #tpu.pipeline_mode<synchronous>, transform_indices = @transform_8, window_bounds = array<i64: 32, 64>}, {pipeline_mode = #tpu.pipeline_mode<synchronous>, transform_indices = @transform_9, window_bounds = array<i64: 1, 64>}, {pipeline_mode = #tpu.pipeline_mode<synchronous>, transform_indices = @transform_10, window_bounds = array<i64: 64, 32>}, {pipeline_mode = #tpu.pipeline_mode<synchronous>, transform_indices = @transform_11, window_bounds = array<i64: 1, 32>}, {transform_indices = @transform_12, window_bounds = array<i64: 16, 32>}]} {
    %c0 = arith.constant 0 : index
    %c0_0 = arith.constant 0 : index
    %0 = vector.load %arg1[%c0, %c0_0] : memref<16x32xf32, #tpu.memory_space<vmem>>, vector<16x32xf32>
    %c0_1 = arith.constant 0 : index
    %c0_2 = arith.constant 0 : index
    %1 = vector.load %arg2[%c0_1, %c0_2] : memref<1x32xf32, #tpu.memory_space<vmem>>, vector<1x32xf32>
    %c0_3 = arith.constant 0 : index
    %c0_4 = arith.constant 0 : index
    %2 = vector.load %arg3[%c0_3, %c0_4] : memref<1x32xf32, #tpu.memory_space<vmem>>, vector<1x32xf32>
    %cst = arith.constant dense<0.000000e+00> : vector<16xf32>
    %3 = vector.multi_reduction <add>, %0, %cst [1] : vector<16x32xf32> to vector<16xf32>
    %4 = vector.shape_cast %3 : vector<16xf32> to vector<16x1xf32>
    %cst_5 = arith.constant 3.200000e+01 : f32
    %5 = vector.broadcast %cst_5 : f32 to vector<16x1xf32>
    %6 = arith.divf %4, %5 : vector<16x1xf32>
    %7 = vector.broadcast %6 : vector<16x1xf32> to vector<16x32xf32>
    %8 = arith.subf %0, %7 : vector<16x32xf32>
    %9 = arith.mulf %8, %8 : vector<16x32xf32>
    %cst_6 = arith.constant dense<0.000000e+00> : vector<16xf32>
    %10 = vector.multi_reduction <add>, %9, %cst_6 [1] : vector<16x32xf32> to vector<16xf32>
    %11 = vector.shape_cast %10 : vector<16xf32> to vector<16x1xf32>
    %cst_7 = arith.constant 3.200000e+01 : f32
    %12 = vector.broadcast %cst_7 : f32 to vector<16x1xf32>
    %13 = arith.divf %11, %12 : vector<16x1xf32>
    %14 = vector.broadcast %6 : vector<16x1xf32> to vector<16x32xf32>
    %15 = arith.subf %0, %14 : vector<16x32xf32>
    %cst_8 = arith.constant 9.99999974E-6 : f32
    %16 = vector.broadcast %cst_8 : f32 to vector<16x1xf32>
    %17 = arith.addf %13, %16 : vector<16x1xf32>
    %18 = math.rsqrt %17 : vector<16x1xf32>
    %19 = vector.broadcast %18 : vector<16x1xf32> to vector<16x32xf32>
    %20 = arith.mulf %15, %19 : vector<16x32xf32>
    %21 = vector.broadcast %1 : vector<1x32xf32> to vector<16x32xf32>
    %22 = arith.mulf %20, %21 : vector<16x32xf32>
    %23 = vector.broadcast %2 : vector<1x32xf32> to vector<16x32xf32>
    %24 = arith.addf %22, %23 : vector<16x32xf32>
    %25 = arith.truncf %24 : vector<16x32xf32> to vector<16x32xbf16>
    %26 = vector.shape_cast %25 : vector<16x32xbf16> to vector<1x16x32xbf16>
    %27 = vector.broadcast %26 : vector<1x16x32xbf16> to vector<12x16x32xbf16>
    %c0_9 = arith.constant 0 : index
    %c0_10 = arith.constant 0 : index
    %c0_11 = arith.constant 0 : index
    %28 = vector.load %arg4[%c0_9, %c0_10, %c0_11] : memref<12x32x8xbf16, #tpu.memory_space<vmem>>, vector<12x32x8xbf16>
    "tpu.trace_start"() <{level = 10 : i32, message = "gnd,gde->gne"}> : () -> ()
    %cst_12 = arith.constant dense<0.000000e+00> : vector<12x16x8xf32>
    %29 = tpu.matmul %27, %28, %cst_12 {dimension_numbers = #tpu.dot_dimension_numbers<[2], [1], [1], [2], [0, 0, 0, 1, 1, 2], [0], [0]>} : vector<12x16x32xbf16>, vector<12x32x8xbf16>, vector<12x16x8xf32> -> vector<12x16x8xf32>
    "tpu.trace_stop"() : () -> ()
    %30 = vector.extract_strided_slice %29 {offsets = [0, 0, 0], sizes = [4, 16, 8], strides = [1, 1, 1]} : vector<12x16x8xf32> to vector<4x16x8xf32>
    %31 = vector.shape_cast %30 : vector<4x16x8xf32> to vector<8x8x8xf32>
    %32 = arith.truncf %31 : vector<8x8x8xf32> to vector<8x8x8xbf16>
    %33 = vector.extract_strided_slice %29 {offsets = [4, 0, 0], sizes = [4, 16, 8], strides = [1, 1, 1]} : vector<12x16x8xf32> to vector<4x16x8xf32>
    %34 = vector.shape_cast %33 : vector<4x16x8xf32> to vector<8x8x8xf32>
    %35 = arith.truncf %34 : vector<8x8x8xf32> to vector<8x8x8xbf16>
    %36 = vector.extract_strided_slice %29 {offsets = [8, 0, 0], sizes = [4, 16, 8], strides = [1, 1, 1]} : vector<12x16x8xf32> to vector<4x16x8xf32>
    %37 = vector.shape_cast %36 : vector<4x16x8xf32> to vector<8x8x8xf32>
    %38 = arith.truncf %37 : vector<8x8x8xf32> to vector<8x8x8xbf16>
    "tpu.trace_start"() <{level = 10 : i32, message = "nqe,nke->nqk"}> : () -> ()
    %cst_13 = arith.constant dense<0.000000e+00> : vector<8x8x8xf32>
    %39 = tpu.matmul %32, %35, %cst_13 {dimension_numbers = #tpu.dot_dimension_numbers<[2], [2], [1], [1], [0, 0, 0, 1, 1, 1], [0], [0]>} : vector<8x8x8xbf16>, vector<8x8x8xbf16>, vector<8x8x8xf32> -> vector<8x8x8xf32>
    "tpu.trace_stop"() : () -> ()
    %cst_14 = arith.constant dense<0xFF800000> : vector<8x8xf32>
    %40 = vector.multi_reduction <maximumf>, %39, %cst_14 [2] : vector<8x8x8xf32> to vector<8x8xf32>
    %41 = vector.shape_cast %40 : vector<8x8xf32> to vector<8x8x1xf32>
    %42 = vector.broadcast %41 : vector<8x8x1xf32> to vector<8x8x8xf32>
    %43 = arith.subf %39, %42 : vector<8x8x8xf32>
    %44 = math.exp %43 : vector<8x8x8xf32>
    %cst_15 = arith.constant dense<0.000000e+00> : vector<8x8xf32>
    %45 = vector.multi_reduction <add>, %44, %cst_15 [2] : vector<8x8x8xf32> to vector<8x8xf32>
    %46 = vector.shape_cast %45 : vector<8x8xf32> to vector<8x8x1xf32>
    %47 = tpu.reciprocal %46 {approx = true} : vector<8x8x1xf32> -> vector<8x8x1xf32>
    %48 = vector.broadcast %47 : vector<8x8x1xf32> to vector<8x8x8xf32>
    %49 = arith.mulf %44, %48 : vector<8x8x8xf32>
    %50 = arith.truncf %49 : vector<8x8x8xf32> to vector<8x8x8xbf16>
    "tpu.trace_start"() <{level = 10 : i32, message = "nqk,nke->nqe"}> : () -> ()
    %cst_16 = arith.constant dense<0.000000e+00> : vector<8x8x8xf32>
    %51 = tpu.matmul %50, %38, %cst_16 {dimension_numbers = #tpu.dot_dimension_numbers<[2], [1], [1], [2], [0, 0, 0, 1, 1, 2], [0], [0]>} : vector<8x8x8xbf16>, vector<8x8x8xbf16>, vector<8x8x8xf32> -> vector<8x8x8xf32>
    "tpu.trace_stop"() : () -> ()
    %52 = vector.shape_cast %51 : vector<8x8x8xf32> to vector<4x16x8xf32>
    %53 = arith.truncf %52 : vector<4x16x8xf32> to vector<4x16x8xbf16>
    %c0_17 = arith.constant 0 : index
    %c0_18 = arith.constant 0 : index
    %c0_19 = arith.constant 0 : index
    %54 = vector.load %arg5[%c0_17, %c0_18, %c0_19] : memref<4x8x32xbf16, #tpu.memory_space<vmem>>, vector<4x8x32xbf16>
    "tpu.trace_start"() <{level = 10 : i32, message = "hne,hed->hnd"}> : () -> ()
    %cst_20 = arith.constant dense<0.000000e+00> : vector<4x16x32xf32>
    %55 = tpu.matmul %53, %54, %cst_20 {dimension_numbers = #tpu.dot_dimension_numbers<[2], [1], [1], [2], [0, 0, 0, 1, 1, 2], [0], [0]>} : vector<4x16x8xbf16>, vector<4x8x32xbf16>, vector<4x16x32xf32> -> vector<4x16x32xf32>
    "tpu.trace_stop"() : () -> ()
    %cst_21 = arith.constant dense<0.000000e+00> : vector<16x32xf32>
    %56 = vector.multi_reduction <add>, %55, %cst_21 [0] : vector<4x16x32xf32> to vector<16x32xf32>
    %c0_22 = arith.constant 0 : index
    %c0_23 = arith.constant 0 : index
    %57 = vector.load %arg6[%c0_22, %c0_23] : memref<1x32xf32, #tpu.memory_space<vmem>>, vector<1x32xf32>
    %58 = vector.broadcast %57 : vector<1x32xf32> to vector<16x32xf32>
    %59 = arith.addf %56, %58 : vector<16x32xf32>
    %60 = arith.addf %0, %59 : vector<16x32xf32>
    %c0_24 = arith.constant 0 : index
    %c0_25 = arith.constant 0 : index
    %61 = vector.load %arg7[%c0_24, %c0_25] : memref<1x32xf32, #tpu.memory_space<vmem>>, vector<1x32xf32>
    %c0_26 = arith.constant 0 : index
    %c0_27 = arith.constant 0 : index
    %62 = vector.load %arg8[%c0_26, %c0_27] : memref<1x32xf32, #tpu.memory_space<vmem>>, vector<1x32xf32>
    %cst_28 = arith.constant dense<0.000000e+00> : vector<16xf32>
    %63 = vector.multi_reduction <add>, %60, %cst_28 [1] : vector<16x32xf32> to vector<16xf32>
    %64 = vector.shape_cast %63 : vector<16xf32> to vector<16x1xf32>
    %cst_29 = arith.constant 3.200000e+01 : f32
    %65 = vector.broadcast %cst_29 : f32 to vector<16x1xf32>
    %66 = arith.divf %64, %65 : vector<16x1xf32>
    %67 = vector.broadcast %66 : vector<16x1xf32> to vector<16x32xf32>
    %68 = arith.subf %60, %67 : vector<16x32xf32>
    %69 = arith.mulf %68, %68 : vector<16x32xf32>
    %cst_30 = arith.constant dense<0.000000e+00> : vector<16xf32>
    %70 = vector.multi_reduction <add>, %69, %cst_30 [1] : vector<16x32xf32> to vector<16xf32>
    %71 = vector.shape_cast %70 : vector<16xf32> to vector<16x1xf32>
    %cst_31 = arith.constant 3.200000e+01 : f32
    %72 = vector.broadcast %cst_31 : f32 to vector<16x1xf32>
    %73 = arith.divf %71, %72 : vector<16x1xf32>
    %74 = vector.broadcast %66 : vector<16x1xf32> to vector<16x32xf32>
    %75 = arith.subf %60, %74 : vector<16x32xf32>
    %cst_32 = arith.constant 9.99999974E-6 : f32
    %76 = vector.broadcast %cst_32 : f32 to vector<16x1xf32>
    %77 = arith.addf %73, %76 : vector<16x1xf32>
    %78 = math.rsqrt %77 : vector<16x1xf32>
    %79 = vector.broadcast %78 : vector<16x1xf32> to vector<16x32xf32>
    %80 = arith.mulf %75, %79 : vector<16x32xf32>
    %81 = vector.broadcast %61 : vector<1x32xf32> to vector<16x32xf32>
    %82 = arith.mulf %80, %81 : vector<16x32xf32>
    %83 = vector.broadcast %62 : vector<1x32xf32> to vector<16x32xf32>
    %84 = arith.addf %82, %83 : vector<16x32xf32>
    %85 = arith.truncf %84 : vector<16x32xf32> to vector<16x32xbf16>
    %c0_33 = arith.constant 0 : index
    %c0_34 = arith.constant 0 : index
    %86 = vector.load %arg9[%c0_33, %c0_34] : memref<32x64xbf16, #tpu.memory_space<vmem>>, vector<32x64xbf16>
    %cst_35 = arith.constant dense<0.000000e+00> : vector<16x64xf32>
    %87 = tpu.matmul %85, %86, %cst_35 {dimension_numbers = #tpu.dot_dimension_numbers<[1], [0], [0], [1], [0, 0, 1, 1], [], []>} : vector<16x32xbf16>, vector<32x64xbf16>, vector<16x64xf32> -> vector<16x64xf32>
    %c0_36 = arith.constant 0 : index
    %c0_37 = arith.constant 0 : index
    %88 = vector.load %arg10[%c0_36, %c0_37] : memref<1x64xf32, #tpu.memory_space<vmem>>, vector<1x64xf32>
    %89 = vector.broadcast %88 : vector<1x64xf32> to vector<16x64xf32>
    %90 = arith.addf %87, %89 : vector<16x64xf32>
    %cst_38 = arith.constant 0.000000e+00 : f32
    %91 = vector.broadcast %cst_38 : f32 to vector<16x64xf32>
    %92 = arith.maximumf %90, %91 : vector<16x64xf32>
    %93 = arith.truncf %92 : vector<16x64xf32> to vector<16x64xbf16>
    %c0_39 = arith.constant 0 : index
    %c0_40 = arith.constant 0 : index
    %94 = vector.load %arg11[%c0_39, %c0_40] : memref<64x32xbf16, #tpu.memory_space<vmem>>, vector<64x32xbf16>
    %cst_41 = arith.constant dense<0.000000e+00> : vector<16x32xf32>
    %95 = tpu.matmul %93, %94, %cst_41 {dimension_numbers = #tpu.dot_dimension_numbers<[1], [0], [0], [1], [0, 0, 1, 1], [], []>} : vector<16x64xbf16>, vector<64x32xbf16>, vector<16x32xf32> -> vector<16x32xf32>
    %c0_42 = arith.constant 0 : index
    %c0_43 = arith.constant 0 : index
    %96 = vector.load %arg12[%c0_42, %c0_43] : memref<1x32xf32, #tpu.memory_space<vmem>>, vector<1x32xf32>
    %97 = vector.broadcast %96 : vector<1x32xf32> to vector<16x32xf32>
    %98 = arith.addf %95, %97 : vector<16x32xf32>
    %99 = arith.addf %60, %98 : vector<16x32xf32>
    %c0_44 = arith.constant 0 : index
    %c0_45 = arith.constant 0 : index
    %100 = vector.load %arg13[%c0_44, %c0_45] : memref<16x32xf32, #tpu.memory_space<vmem>>, vector<16x32xf32>
    tpu.vector_store %arg13[%c0_44, %c0_45], %99 {strides = array<i32>} : memref<16x32xf32, #tpu.memory_space<vmem>>, vector<16x32xf32>,
    return
  }
  func.func @transform_0(%arg0: i32) -> (i32, i32) {
    %c0_i32 = arith.constant 0 : i32
    %c0_i32_0 = arith.constant 0 : i32
    return %arg0, %c0_i32 : i32, i32
  }
  func.func @transform_1(%arg0: i32) -> (i32, i32) {
    %c0_i32 = arith.constant 0 : i32
    %c0_i32_0 = arith.constant 0 : i32
    %c0_i32_1 = arith.constant 0 : i32
    return %c0_i32, %c0_i32_0 : i32, i32
  }
  func.func @transform_2(%arg0: i32) -> (i32, i32) {
    %c0_i32 = arith.constant 0 : i32
    %c0_i32_0 = arith.constant 0 : i32
    %c0_i32_1 = arith.constant 0 : i32
    return %c0_i32, %c0_i32_0 : i32, i32
  }
  func.func @transform_3(%arg0: i32) -> (i32, i32, i32) {
    %c0_i32 = arith.constant 0 : i32
    %c0_i32_0 = arith.constant 0 : i32
    %c0_i32_1 = arith.constant 0 : i32
    %c0_i32_2 = arith.constant 0 : i32
    return %c0_i32, %c0_i32_0, %c0_i32_1 : i32, i32, i32
  }
  func.func @transform_4(%arg0: i32) -> (i32, i32, i32) {
    %c0_i32 = arith.constant 0 : i32
    %c0_i32_0 = arith.constant 0 : i32
    %c0_i32_1 = arith.constant 0 : i32
    %c0_i32_2 = arith.constant 0 : i32
    return %c0_i32, %c0_i32_0, %c0_i32_1 : i32, i32, i32
  }
  func.func @transform_5(%arg0: i32) -> (i32, i32) {
    %c0_i32 = arith.constant 0 : i32
    %c0_i32_0 = arith.constant 0 : i32
    %c0_i32_1 = arith.constant 0 : i32
    return %c0_i32, %c0_i32_0 : i32, i32
  }
  func.func @transform_6(%arg0: i32) -> (i32, i32) {
    %c0_i32 = arith.constant 0 : i32
    %c0_i32_0 = arith.constant 0 : i32
    %c0_i32_1 = arith.constant 0 : i32
    return %c0_i32, %c0_i32_0 : i32, i32
  }
  func.func @transform_7(%arg0: i32) -> (i32, i32) {
    %c0_i32 = arith.constant 0 : i32
    %c0_i32_0 = arith.constant 0 : i32
    %c0_i32_1 = arith.constant 0 : i32
    return %c0_i32, %c0_i32_0 : i32, i32
  }
  func.func @transform_8(%arg0: i32) -> (i32, i32) {
    %c0_i32 = arith.constant 0 : i32
    %c0_i32_0 = arith.constant 0 : i32
    %c0_i32_1 = arith.constant 0 : i32
    return %c0_i32, %c0_i32_0 : i32, i32
  }
  func.func @transform_9(%arg0: i32) -> (i32, i32) {
    %c0_i32 = arith.constant 0 : i32
    %c0_i32_0 = arith.constant 0 : i32
    %c0_i32_1 = arith.constant 0 : i32
    return %c0_i32, %c0_i32_0 : i32, i32
  }
  func.func @transform_10(%arg0: i32) -> (i32, i32) {
    %c0_i32 = arith.constant 0 : i32
    %c0_i32_0 = arith.constant 0 : i32
    %c0_i32_1 = arith.constant 0 : i32
    return %c0_i32, %c0_i32_0 : i32, i32
  }
  func.func @transform_11(%arg0: i32) -> (i32, i32) {
    %c0_i32 = arith.constant 0 : i32
    %c0_i32_0 = arith.constant 0 : i32
    %c0_i32_1 = arith.constant 0 : i32
    return %c0_i32, %c0_i32_0 : i32, i32
  }
  func.func @transform_12(%arg0: i32) -> (i32, i32) {
    %c0_i32 = arith.constant 0 : i32
    %c0_i32_0 = arith.constant 0 : i32
    return %arg0, %c0_i32 : i32, i32
  }
}

</mosaic_0001>

<llo_original>
// kernel: tpu_custom_call.1
$region0: #{tpu_custom_call.1}
  #allocation0 [shape = 'u32[]', space=smem, size = 0x4, offset = 0x4, fixed_abs, tag = 'smem constant byte address 0x4 - core index']
  #allocation1 [shape = 'u32[72,128]{1,0:T(1,128)}', space=vmem, size = 0x9000, scoped, tag = 'internal scratch']
  %s0 = inlined_call_operand.vmem [shape: f32[16,32], index: 0, kind: input, shape index: {}]
  %s1 = inlined_call_operand.vmem [shape: f32[1,32], index: 1, kind: input, shape index: {}]
  %s2 = inlined_call_operand.vmem [shape: f32[1,32], index: 2, kind: input, shape index: {}]
  %s3 = inlined_call_operand.vmem [shape: bf16[12,32,8], index: 3, kind: input, shape index: {}]
  %s4 = inlined_call_operand.vmem [shape: bf16[4,8,32], index: 4, kind: input, shape index: {}]
  %s5 = inlined_call_operand.vmem [shape: f32[1,32], index: 5, kind: input, shape index: {}]
  %s6 = inlined_call_operand.vmem [shape: f32[1,32], index: 6, kind: input, shape index: {}]
  %s7 = inlined_call_operand.vmem [shape: f32[1,32], index: 7, kind: input, shape index: {}]
  %s8 = inlined_call_operand.vmem [shape: bf16[32,64], index: 8, kind: input, shape index: {}]
  %s9 = inlined_call_operand.vmem [shape: f32[1,64], index: 9, kind: input, shape index: {}]
  %s10 = inlined_call_operand.vmem [shape: bf16[64,32], index: 10, kind: input, shape index: {}]
  %s11 = inlined_call_operand.vmem [shape: f32[1,32], index: 11, kind: input, shape index: {}]
  %s12 = inlined_call_operand.hbm [shape: f32[16,32], index: 12, kind: output, shape index: {}]
  %s13 = sld [smem:[#allocation0]]
  $region58: #{tpu_custom_call.1} parent=0
    _
  %s15 = ssub.s32 1, %s13
  %s16 = scalar_select 0, %s15, %s13
  $region1: #{tpu_custom_call.1} parent=0
    #allocation2 [shape = 'u8[8192]{0}', space=vmem, size = 0x2000, scoped, tag = 'output window, operand 0, single buffered']
    #allocation3 [shape = 's32[1]{0}', space=sflag, size = 0x4, scoped, tag = 'scoped memory for tpu_custom_call.1']
    %17 = vsyncpa [#allocation3], 0
    // Predicated region
    $region2: #{tpu_custom_call.1} parent=1 // pred_check
      _
    $region3: #{tpu_custom_call.1} parent=1 // pred_check_branch
      %19 = sbr.rel (0) target = $region5
    $region4: #{tpu_custom_call.1} parent=1 // pred_region
      _
    $region5: #{tpu_custom_call.1} parent=1 // pred_fallthru
      _
    // Predicated region
    $region6: #{tpu_custom_call.1} parent=1 // pred_check
      _
    $region7: #{tpu_custom_call.1} parent=1 // pred_check_branch
      %21 = sbr.rel (0) target = $region9
    $region8: #{tpu_custom_call.1} parent=1 // pred_region
      _
    $region9: #{tpu_custom_call.1} parent=1 // pred_fallthru
      _
    // Predicated region
    $region10: #{tpu_custom_call.1} parent=1 // pred_check
      _
    $region11: #{tpu_custom_call.1} parent=1 // pred_check_branch
      %23 = sbr.rel (0) target = $region13
    $region12: #{tpu_custom_call.1} parent=1 // pred_region
      _
    $region13: #{tpu_custom_call.1} parent=1 // pred_fallthru
      _
    // Predicated region
    $region14: #{tpu_custom_call.1} parent=1 // pred_check
      _
    $region15: #{tpu_custom_call.1} parent=1 // pred_check_branch
      %25 = sbr.rel (0) target = $region17
    $region16: #{tpu_custom_call.1} parent=1 // pred_region
      _
    $region17: #{tpu_custom_call.1} parent=1 // pred_fallthru
      _
    // Predicated region
    $region18: #{tpu_custom_call.1} parent=1 // pred_check
      _
    $region19: #{tpu_custom_call.1} parent=1 // pred_check_branch
      %27 = sbr.rel (0) target = $region21
    $region20: #{tpu_custom_call.1} parent=1 // pred_region
      _
    $region21: #{tpu_custom_call.1} parent=1 // pred_fallthru
      _
    // Predicated region
    $region22: #{tpu_custom_call.1} parent=1 // pred_check
      _
    $region23: #{tpu_custom_call.1} parent=1 // pred_check_branch
      %29 = sbr.rel (0) target = $region25
    $region24: #{tpu_custom_call.1} parent=1 // pred_region
      _
    $region25: #{tpu_custom_call.1} parent=1 // pred_fallthru
      _
    // Predicated region
    $region26: #{tpu_custom_call.1} parent=1 // pred_check
      _
    $region27: #{tpu_custom_call.1} parent=1 // pred_check_branch
      %31 = sbr.rel (0) target = $region29
    $region28: #{tpu_custom_call.1} parent=1 // pred_region
      _
    $region29: #{tpu_custom_call.1} parent=1 // pred_fallthru
      _
    // Predicated region
    $region30: #{tpu_custom_call.1} parent=1 // pred_check
      _
    $region31: #{tpu_custom_call.1} parent=1 // pred_check_branch
      %33 = sbr.rel (0) target = $region33
    $region32: #{tpu_custom_call.1} parent=1 // pred_region
      _
    $region33: #{tpu_custom_call.1} parent=1 // pred_fallthru
      _
    // Predicated region
    $region34: #{tpu_custom_call.1} parent=1 // pred_check
      _
    $region35: #{tpu_custom_call.1} parent=1 // pred_check_branch
      %35 = sbr.rel (0) target = $region37
    $region36: #{tpu_custom_call.1} parent=1 // pred_region
      _
    $region37: #{tpu_custom_call.1} parent=1 // pred_fallthru
      _
    // Predicated region
    $region38: #{tpu_custom_call.1} parent=1 // pred_check
      _
    $region39: #{tpu_custom_call.1} parent=1 // pred_check_branch
      %37 = sbr.rel (0) target = $region41
    $region40: #{tpu_custom_call.1} parent=1 // pred_region
      _
    $region41: #{tpu_custom_call.1} parent=1 // pred_fallthru
      _
    // Predicated region
    $region42: #{tpu_custom_call.1} parent=1 // pred_check
      _
    $region43: #{tpu_custom_call.1} parent=1 // pred_check_branch
      %39 = sbr.rel (0) target = $region45
    $region44: #{tpu_custom_call.1} parent=1 // pred_region
      _
    $region45: #{tpu_custom_call.1} parent=1 // pred_fallthru
      _
    // Predicated region
    $region46: #{tpu_custom_call.1} parent=1 // pred_check
      _
    $region47: #{tpu_custom_call.1} parent=1 // pred_check_branch
      %41 = sbr.rel (0) target = $region49
    $region48: #{tpu_custom_call.1} parent=1 // pred_region
      _
    $region49: #{tpu_custom_call.1} parent=1 // pred_fallthru
      _
    %v43 = vld [vmem:[%s0] sm:$0xff]
    %v44 = vld [vmem:[%s0 + $0x8] sm:$0xff]
    %v45 = vld [vmem:[%s1] sm:$0x1]
    %v46 = vld [vmem:[%s2] sm:$0x1]
    %vm47 = vcmask 261120
    %v48 = vsel %vm47, %v43, 0.0
    %49 = vadd.xlane.f32.xlu0 %v48
    %v50 = vpop.xlane.xlu0 %49
    %v51 = vsel %vm47, %v44, 0.0
    %52 = vadd.xlane.f32.xlu0 %v51
    %v53 = vpop.xlane.xlu0 %52
    %v54 = vrcp.pop 32.0
    %v55 = vmul.f32 32.0, %v54
    %v56 = vsub.f32 1.0, %v55
    %v57 = vmul.f32 %v54, %v56
    %v58 = vadd.f32 %v54, %v57
    %vm59 = vweird.f32 %v54
    %v60 = vsel %vm59, %v54, %v58
    %v61 = vmul.f32 %v50, %v60
    %v62 = vmul.f32 %v53, %v60
    %v63 = vsub.f32 %v43, %v61
    %v64 = vsub.f32 %v44, %v62
    %v65 = vmul.f32 %v63, %v63
    %v66 = vmul.f32 %v64, %v64
    %v67 = vsel %vm47, %v65, 0.0
    %68 = vadd.xlane.f32.xlu0 %v67
    %v69 = vpop.xlane.xlu0 %68
    %v70 = vsel %vm47, %v66, 0.0
    %71 = vadd.xlane.f32.xlu0 %v70
    %v72 = vpop.xlane.xlu0 %71
    %v73 = vmul.f32 %v69, %v60
    %v74 = vmul.f32 %v72, %v60
    %v75 = vadd.f32 %v73, 1e-05
    %v76 = vadd.f32 %v74, 1e-05
    %v77 = vrsqrt.pop %v75
    %v78 = vmul.f32 %v77, %v75
    %v79 = vmul.f32 %v78, %v77
    %v80 = vmul.f32 0.5, %v79
    %v81 = vsub.f32 1.5, %v80
    %v82 = vmul.f32 %v77, %v81
    %vm83 = vweird.f32 %v75
    %vm84 = vweird.f32 %v77
    %vm85 = vmor %vm83, %vm84
    %v86 = vsel %vm85, %v77, %v82
    %v87 = vrsqrt.pop %v76
    %v88 = vmul.f32 %v87, %v76
    %v89 = vmul.f32 %v88, %v87
    %v90 = vmul.f32 0.5, %v89
    %v91 = vsub.f32 1.5, %v90
    %v92 = vmul.f32 %v87, %v91
    %vm93 = vweird.f32 %v76
    %vm94 = vweird.f32 %v87
    %vm95 = vmor %vm93, %vm94
    %v96 = vsel %vm95, %v87, %v92
    %v97 = vmul.f32 %v63, %v86
    %v98 = vmul.f32 %v64, %v96
    %v100 = vperm.slane %v45, 0
    %v102 = vmul.f32 %v97, %v100
    %v103 = vmul.f32 %v98, %v100
    %v105 = vperm.slane %v46, 0
    %v107 = vadd.f32 %v102, %v105
    %v108 = vadd.f32 %v103, %v105
    %v109 = vpack.c.bf16 %v107, %v107
    %v110 = vpack.c.bf16 %v108, %v108
    %v111 = vld [vmem:[%s3] sm:$0xf]
    %v112 = vld [vmem:[%s3 + $0x4] sm:$0xf]
    %v113 = vld [vmem:[%s3 + $0x8] sm:$0xf]
    %v114 = vld [vmem:[%s3 + $0xc] sm:$0xf]
    %v115 = vld [vmem:[%s3 + $0x10] sm:$0xf]
    %v116 = vld [vmem:[%s3 + $0x14] sm:$0xf]
    %v117 = vld [vmem:[%s3 + $0x18] sm:$0xf]
    %v118 = vld [vmem:[%s3 + $0x1c] sm:$0xf]
    %v119 = vld [vmem:[%s3 + $0x20] sm:$0xf]
    %v120 = vld [vmem:[%s3 + $0x24] sm:$0xf]
    %v121 = vld [vmem:[%s3 + $0x28] sm:$0xf]
    %v122 = vld [vmem:[%s3 + $0x2c] sm:$0xf]
    %v123 = vld [vmem:[%s3 + $0x30] sm:$0xf]
    %v124 = vld [vmem:[%s3 + $0x34] sm:$0xf]
    %v125 = vld [vmem:[%s3 + $0x38] sm:$0xf]
    %v126 = vld [vmem:[%s3 + $0x3c] sm:$0xf]
    %v127 = vld [vmem:[%s3 + $0x40] sm:$0xf]
    %v128 = vld [vmem:[%s3 + $0x44] sm:$0xf]
    %v129 = vld [vmem:[%s3 + $0x48] sm:$0xf]
    %v130 = vld [vmem:[%s3 + $0x4c] sm:$0xf]
    %v131 = vld [vmem:[%s3 + $0x50] sm:$0xf]
    %v132 = vld [vmem:[%s3 + $0x54] sm:$0xf]
    %v133 = vld [vmem:[%s3 + $0x58] sm:$0xf]
    %v134 = vld [vmem:[%s3 + $0x5c] sm:$0xf]
    %v135 = vld [vmem:[%s3 + $0x60] sm:$0xf]
    %v136 = vld [vmem:[%s3 + $0x64] sm:$0xf]
    %v137 = vld [vmem:[%s3 + $0x68] sm:$0xf]
    %v138 = vld [vmem:[%s3 + $0x6c] sm:$0xf]
    %v139 = vld [vmem:[%s3 + $0x70] sm:$0xf]
    %v140 = vld [vmem:[%s3 + $0x74] sm:$0xf]
    %v141 = vld [vmem:[%s3 + $0x78] sm:$0xf]
    %v142 = vld [vmem:[%s3 + $0x7c] sm:$0xf]
    %v143 = vld [vmem:[%s3 + $0x80] sm:$0xf]
    %v144 = vld [vmem:[%s3 + $0x84] sm:$0xf]
    %v145 = vld [vmem:[%s3 + $0x88] sm:$0xf]
    %v146 = vld [vmem:[%s3 + $0x8c] sm:$0xf]
    %v147 = vld [vmem:[%s3 + $0x90] sm:$0xf]
    %v148 = vld [vmem:[%s3 + $0x94] sm:$0xf]
    %v149 = vld [vmem:[%s3 + $0x98] sm:$0xf]
    %v150 = vld [vmem:[%s3 + $0x9c] sm:$0xf]
    %v151 = vld [vmem:[%s3 + $0xa0] sm:$0xf]
    %v152 = vld [vmem:[%s3 + $0xa4] sm:$0xf]
    %v153 = vld [vmem:[%s3 + $0xa8] sm:$0xf]
    %v154 = vld [vmem:[%s3 + $0xac] sm:$0xf]
    %v155 = vld [vmem:[%s3 + $0xb0] sm:$0xf]
    %v156 = vld [vmem:[%s3 + $0xb4] sm:$0xf]
    %v157 = vld [vmem:[%s3 + $0xb8] sm:$0xf]
    %v158 = vld [vmem:[%s3 + $0xbc] sm:$0xf]
    %v161 = vunpack.c.l.b16 %v109
    %v162 = vunpack.c.l.b16 %v110
    %v163 = vpack.c.b16 %v162, %v161
    %v168 = vunpack.c.l.b16 %v111
    %v169 = vunpack.c.l.b16 %v112
    %v170 = vunpack.c.l.b16 %v113
    %v171 = vunpack.c.l.b16 %v114
    %v172 = vpack.c.b16 %v169, %v168
    %v173 = vpack.c.b16 %v171, %v170
    %v177 = vsel %vm47, %v163, 0
    %179 = vmatpush.bf16.msra.mxu0 0
    %180 = vmatpush.bf16.msra.mxu0 0
    %181 = vmatpush.bf16.msra.mxu0 0
    %182 = vmatpush.bf16.msra.mxu0 0
    %183 = vmatpush.bf16.msra.mxu0 0
    %184 = vmatpush.bf16.msra.mxu0 0
    %185 = vmatpush.bf16.msra.mxu0 %v173
    %186 = vmatpush.bf16.msra.mxu0 %v172
    %187 = vmatmul.bf16.gmra.mxu0 %v177
    %v188 = vpop.f32.mrf.mxu0
    %v189 = vadd.f32 0.0, %v188
    %v190 = vpop.f32.mrf.mxu0
    %v191 = vadd.f32 0.0, %v190
    %192 = vdwg.mxu0
    %v197 = vunpack.c.l.b16 %v115
    %v198 = vunpack.c.l.b16 %v116
    %v199 = vunpack.c.l.b16 %v117
    %v200 = vunpack.c.l.b16 %v118
    %v201 = vpack.c.b16 %v198, %v197
    %v202 = vpack.c.b16 %v200, %v199
    %205 = vmatpush.bf16.msra.mxu0 0
    %206 = vmatpush.bf16.msra.mxu0 0
    %207 = vmatpush.bf16.msra.mxu0 0
    %208 = vmatpush.bf16.msra.mxu0 0
    %209 = vmatpush.bf16.msra.mxu0 0
    %210 = vmatpush.bf16.msra.mxu0 0
    %211 = vmatpush.bf16.msra.mxu0 %v202
    %212 = vmatpush.bf16.msra.mxu0 %v201
    %213 = vmatmul.bf16.gmra.mxu0 %v177
    %v214 = vpop.f32.mrf.mxu0
    %v215 = vadd.f32 0.0, %v214
    %v216 = vpop.f32.mrf.mxu0
    %v217 = vadd.f32 0.0, %v216
    %218 = vdwg.mxu0
    %v223 = vunpack.c.l.b16 %v119
    %v224 = vunpack.c.l.b16 %v120
    %v225 = vunpack.c.l.b16 %v121
    %v226 = vunpack.c.l.b16 %v122
    %v227 = vpack.c.b16 %v224, %v223
    %v228 = vpack.c.b16 %v226, %v225
    %231 = vmatpush.bf16.msra.mxu0 0
    %232 = vmatpush.bf16.msra.mxu0 0
    %233 = vmatpush.bf16.msra.mxu0 0
    %234 = vmatpush.bf16.msra.mxu0 0
    %235 = vmatpush.bf16.msra.mxu0 0
    %236 = vmatpush.bf16.msra.mxu0 0
    %237 = vmatpush.bf16.msra.mxu0 %v228
    %238 = vmatpush.bf16.msra.mxu0 %v227
    %239 = vmatmul.bf16.gmra.mxu0 %v177
    %v240 = vpop.f32.mrf.mxu0
    %v241 = vadd.f32 0.0, %v240
    %v242 = vpop.f32.mrf.mxu0
    %v243 = vadd.f32 0.0, %v242
    %244 = vdwg.mxu0
    %v249 = vunpack.c.l.b16 %v123
    %v250 = vunpack.c.l.b16 %v124
    %v251 = vunpack.c.l.b16 %v125
    %v252 = vunpack.c.l.b16 %v126
    %v253 = vpack.c.b16 %v250, %v249
    %v254 = vpack.c.b16 %v252, %v251
    %257 = vmatpush.bf16.msra.mxu0 0
    %258 = vmatpush.bf16.msra.mxu0 0
    %259 = vmatpush.bf16.msra.mxu0 0
    %260 = vmatpush.bf16.msra.mxu0 0
    %261 = vmatpush.bf16.msra.mxu0 0
    %262 = vmatpush.bf16.msra.mxu0 0
    %263 = vmatpush.bf16.msra.mxu0 %v254
    %264 = vmatpush.bf16.msra.mxu0 %v253
    %265 = vmatmul.bf16.gmra.mxu0 %v177
    %v266 = vpop.f32.mrf.mxu0
    %v267 = vadd.f32 0.0, %v266
    %v268 = vpop.f32.mrf.mxu0
    %v269 = vadd.f32 0.0, %v268
    %270 = vdwg.mxu0
    %v275 = vunpack.c.l.b16 %v127
    %v276 = vunpack.c.l.b16 %v128
    %v277 = vunpack.c.l.b16 %v129
    %v278 = vunpack.c.l.b16 %v130
    %v279 = vpack.c.b16 %v276, %v275
    %v280 = vpack.c.b16 %v278, %v277
    %283 = vmatpush.bf16.msra.mxu0 0
    %284 = vmatpush.bf16.msra.mxu0 0
    %285 = vmatpush.bf16.msra.mxu0 0
    %286 = vmatpush.bf16.msra.mxu0 0
    %287 = vmatpush.bf16.msra.mxu0 0
    %288 = vmatpush.bf16.msra.mxu0 0
    %289 = vmatpush.bf16.msra.mxu0 %v280
    %290 = vmatpush.bf16.msra.mxu0 %v279
    %291 = vmatmul.bf16.gmra.mxu0 %v177
    %v292 = vpop.f32.mrf.mxu0
    %v293 = vadd.f32 0.0, %v292
    %v294 = vpop.f32.mrf.mxu0
    %v295 = vadd.f32 0.0, %v294
    %296 = vdwg.mxu0
    %v301 = vunpack.c.l.b16 %v131
    %v302 = vunpack.c.l.b16 %v132
    %v303 = vunpack.c.l.b16 %v133
    %v304 = vunpack.c.l.b16 %v134
    %v305 = vpack.c.b16 %v302, %v301
    %v306 = vpack.c.b16 %v304, %v303
    %309 = vmatpush.bf16.msra.mxu0 0
    %310 = vmatpush.bf16.msra.mxu0 0
    %311 = vmatpush.bf16.msra.mxu0 0
    %312 = vmatpush.bf16.msra.mxu0 0
    %313 = vmatpush.bf16.msra.mxu0 0
    %314 = vmatpush.bf16.msra.mxu0 0
    %315 = vmatpush.bf16.msra.mxu0 %v306
    %316 = vmatpush.bf16.msra.mxu0 %v305
    %317 = vmatmul.bf16.gmra.mxu0 %v177
    %v318 = vpop.f32.mrf.mxu0
    %v319 = vadd.f32 0.0, %v318
    %v320 = vpop.f32.mrf.mxu0
    %v321 = vadd.f32 0.0, %v320
    %322 = vdwg.mxu0
    %v327 = vunpack.c.l.b16 %v135
    %v328 = vunpack.c.l.b16 %v136
    %v329 = vunpack.c.l.b16 %v137
    %v330 = vunpack.c.l.b16 %v138
    %v331 = vpack.c.b16 %v328, %v327
    %v332 = vpack.c.b16 %v330, %v329
    %335 = vmatpush.bf16.msra.mxu0 0
    %336 = vmatpush.bf16.msra.mxu0 0
    %337 = vmatpush.bf16.msra.mxu0 0
    %338 = vmatpush.bf16.msra.mxu0 0
    %339 = vmatpush.bf16.msra.mxu0 0
    %340 = vmatpush.bf16.msra.mxu0 0
    %341 = vmatpush.bf16.msra.mxu0 %v332
    %342 = vmatpush.bf16.msra.mxu0 %v331
    %343 = vmatmul.bf16.gmra.mxu0 %v177
    %v344 = vpop.f32.mrf.mxu0
    %v345 = vadd.f32 0.0, %v344
    %v346 = vpop.f32.mrf.mxu0
    %v347 = vadd.f32 0.0, %v346
    %348 = vdwg.mxu0
    %v353 = vunpack.c.l.b16 %v139
    %v354 = vunpack.c.l.b16 %v140
    %v355 = vunpack.c.l.b16 %v141
    %v356 = vunpack.c.l.b16 %v142
    %v357 = vpack.c.b16 %v354, %v353
    %v358 = vpack.c.b16 %v356, %v355
    %361 = vmatpush.bf16.msra.mxu0 0
    %362 = vmatpush.bf16.msra.mxu0 0
    %363 = vmatpush.bf16.msra.mxu0 0
    %364 = vmatpush.bf16.msra.mxu0 0
    %365 = vmatpush.bf16.msra.mxu0 0
    %366 = vmatpush.bf16.msra.mxu0 0
    %367 = vmatpush.bf16.msra.mxu0 %v358
    %368 = vmatpush.bf16.msra.mxu0 %v357
    %369 = vmatmul.bf16.gmra.mxu0 %v177
    %v370 = vpop.f32.mrf.mxu0
    %v371 = vadd.f32 0.0, %v370
    %v372 = vpop.f32.mrf.mxu0
    %v373 = vadd.f32 0.0, %v372
    %374 = vdwg.mxu0
    %v379 = vunpack.c.l.b16 %v143
    %v380 = vunpack.c.l.b16 %v144
    %v381 = vunpack.c.l.b16 %v145
    %v382 = vunpack.c.l.b16 %v146
    %v383 = vpack.c.b16 %v380, %v379
    %v384 = vpack.c.b16 %v382, %v381
    %387 = vmatpush.bf16.msra.mxu0 0
    %388 = vmatpush.bf16.msra.mxu0 0
    %389 = vmatpush.bf16.msra.mxu0 0
    %390 = vmatpush.bf16.msra.mxu0 0
    %391 = vmatpush.bf16.msra.mxu0 0
    %392 = vmatpush.bf16.msra.mxu0 0
    %393 = vmatpush.bf16.msra.mxu0 %v384
    %394 = vmatpush.bf16.msra.mxu0 %v383
    %395 = vmatmul.bf16.gmra.mxu0 %v177
    %v396 = vpop.f32.mrf.mxu0
    %v397 = vadd.f32 0.0, %v396
    %v398 = vpop.f32.mrf.mxu0
    %v399 = vadd.f32 0.0, %v398
    %400 = vdwg.mxu0
    %v405 = vunpack.c.l.b16 %v147
    %v406 = vunpack.c.l.b16 %v148
    %v407 = vunpack.c.l.b16 %v149
    %v408 = vunpack.c.l.b16 %v150
    %v409 = vpack.c.b16 %v406, %v405
    %v410 = vpack.c.b16 %v408, %v407
    %413 = vmatpush.bf16.msra.mxu0 0
    %414 = vmatpush.bf16.msra.mxu0 0
    %415 = vmatpush.bf16.msra.mxu0 0
    %416 = vmatpush.bf16.msra.mxu0 0
    %417 = vmatpush.bf16.msra.mxu0 0
    %418 = vmatpush.bf16.msra.mxu0 0
    %419 = vmatpush.bf16.msra.mxu0 %v410
    %420 = vmatpush.bf16.msra.mxu0 %v409
    %421 = vmatmul.bf16.gmra.mxu0 %v177
    %v422 = vpop.f32.mrf.mxu0
    %v423 = vadd.f32 0.0, %v422
    %v424 = vpop.f32.mrf.mxu0
    %v425 = vadd.f32 0.0, %v424
    %426 = vdwg.mxu0
    %v431 = vunpack.c.l.b16 %v151
    %v432 = vunpack.c.l.b16 %v152
    %v433 = vunpack.c.l.b16 %v153
    %v434 = vunpack.c.l.b16 %v154
    %v435 = vpack.c.b16 %v432, %v431
    %v436 = vpack.c.b16 %v434, %v433
    %439 = vmatpush.bf16.msra.mxu0 0
    %440 = vmatpush.bf16.msra.mxu0 0
    %441 = vmatpush.bf16.msra.mxu0 0
    %442 = vmatpush.bf16.msra.mxu0 0
    %443 = vmatpush.bf16.msra.mxu0 0
    %444 = vmatpush.bf16.msra.mxu0 0
    %445 = vmatpush.bf16.msra.mxu0 %v436
    %446 = vmatpush.bf16.msra.mxu0 %v435
    %447 = vmatmul.bf16.gmra.mxu0 %v177
    %v448 = vpop.f32.mrf.mxu0
    %v449 = vadd.f32 0.0, %v448
    %v450 = vpop.f32.mrf.mxu0
    %v451 = vadd.f32 0.0, %v450
    %452 = vdwg.mxu0
    %v457 = vunpack.c.l.b16 %v155
    %v458 = vunpack.c.l.b16 %v156
    %v459 = vunpack.c.l.b16 %v157
    %v460 = vunpack.c.l.b16 %v158
    %v461 = vpack.c.b16 %v458, %v457
    %v462 = vpack.c.b16 %v460, %v459
    %465 = vmatpush.bf16.msra.mxu0 0
    %466 = vmatpush.bf16.msra.mxu0 0
    %467 = vmatpush.bf16.msra.mxu0 0
    %468 = vmatpush.bf16.msra.mxu0 0
    %469 = vmatpush.bf16.msra.mxu0 0
    %470 = vmatpush.bf16.msra.mxu0 0
    %471 = vmatpush.bf16.msra.mxu0 %v462
    %472 = vmatpush.bf16.msra.mxu0 %v461
    %473 = vmatmul.bf16.gmra.mxu0 %v177
    %v474 = vpop.f32.mrf.mxu0
    %v475 = vadd.f32 0.0, %v474
    %v476 = vpop.f32.mrf.mxu0
    %v477 = vadd.f32 0.0, %v476
    %478 = vdwg.mxu0
    %v479 = vpack.c.bf16 %v189, %v189
    %v480 = vpack.c.bf16 %v191, %v191
    %v481 = vpack.c.bf16 %v215, %v215
    %v482 = vpack.c.bf16 %v217, %v217
    %v483 = vpack.c.bf16 %v241, %v241
    %v484 = vpack.c.bf16 %v243, %v243
    %v485 = vpack.c.bf16 %v267, %v267
    %v486 = vpack.c.bf16 %v269, %v269
    %v487 = vpack.c.bf16 %v293, %v293
    %v488 = vpack.c.bf16 %v295, %v295
    %v489 = vpack.c.bf16 %v319, %v319
    %v490 = vpack.c.bf16 %v321, %v321
    %v491 = vpack.c.bf16 %v345, %v345
    %v492 = vpack.c.bf16 %v347, %v347
    %v493 = vpack.c.bf16 %v371, %v371
    %v494 = vpack.c.bf16 %v373, %v373
    %v495 = vpack.c.bf16 %v397, %v397
    %v496 = vpack.c.bf16 %v399, %v399
    %v497 = vpack.c.bf16 %v423, %v423
    %v498 = vpack.c.bf16 %v425, %v425
    %v499 = vpack.c.bf16 %v449, %v449
    %v500 = vpack.c.bf16 %v451, %v451
    %v501 = vpack.c.bf16 %v475, %v475
    %v502 = vpack.c.bf16 %v477, %v477
    %vm503 = vcmask 64512
    %v505 = vsel %vm503, %v479, 0
    %v508 = vsel %vm503, %v487, 0
    %510 = vmatpush.bf16.xpose.msra.mxu0 0
    %511 = vmatpush.bf16.xpose.msra.mxu0 0
    %512 = vmatpush.bf16.xpose.msra.mxu0 0
    %513 = vmatpush.bf16.xpose.msra.mxu0 0
    %514 = vmatpush.bf16.xpose.msra.mxu0 0
    %515 = vmatpush.bf16.xpose.msra.mxu0 0
    %516 = vmatpush.bf16.xpose.msra.mxu0 0
    %517 = vmatpush.bf16.xpose.msra.mxu0 %v508
    %518 = vmatmul.bf16.gmra.mxu0 %v505
    %v519 = vpop.f32.mrf.mxu0
    %v520 = vadd.f32 0.0, %v519
    %v521 = vpop.f32.mrf.mxu0
    %522 = vdwg.mxu0
    %v524 = vsel %vm503, %v480, 0
    %v527 = vsel %vm503, %v488, 0
    %529 = vmatpush.bf16.xpose.msra.mxu0 0
    %530 = vmatpush.bf16.xpose.msra.mxu0 0
    %531 = vmatpush.bf16.xpose.msra.mxu0 0
    %532 = vmatpush.bf16.xpose.msra.mxu0 0
    %533 = vmatpush.bf16.xpose.msra.mxu0 0
    %534 = vmatpush.bf16.xpose.msra.mxu0 0
    %535 = vmatpush.bf16.xpose.msra.mxu0 0
    %536 = vmatpush.bf16.xpose.msra.mxu0 %v527
    %537 = vmatmul.bf16.gmra.mxu0 %v524
    %v538 = vpop.f32.mrf.mxu0
    %v539 = vadd.f32 0.0, %v538
    %v540 = vpop.f32.mrf.mxu0
    %541 = vdwg.mxu0
    %v543 = vsel %vm503, %v481, 0
    %v546 = vsel %vm503, %v489, 0
    %548 = vmatpush.bf16.xpose.msra.mxu0 0
    %549 = vmatpush.bf16.xpose.msra.mxu0 0
    %550 = vmatpush.bf16.xpose.msra.mxu0 0
    %551 = vmatpush.bf16.xpose.msra.mxu0 0
    %552 = vmatpush.bf16.xpose.msra.mxu0 0
    %553 = vmatpush.bf16.xpose.msra.mxu0 0
    %554 = vmatpush.bf16.xpose.msra.mxu0 0
    %555 = vmatpush.bf16.xpose.msra.mxu0 %v546
    %556 = vmatmul.bf16.gmra.mxu0 %v543
    %v557 = vpop.f32.mrf.mxu0
    %v558 = vadd.f32 0.0, %v557
    %v559 = vpop.f32.mrf.mxu0
    %560 = vdwg.mxu0
    %v562 = vsel %vm503, %v482, 0
    %v565 = vsel %vm503, %v490, 0
    %567 = vmatpush.bf16.xpose.msra.mxu0 0
    %568 = vmatpush.bf16.xpose.msra.mxu0 0
    %569 = vmatpush.bf16.xpose.msra.mxu0 0
    %570 = vmatpush.bf16.xpose.msra.mxu0 0
    %571 = vmatpush.bf16.xpose.msra.mxu0 0
    %572 = vmatpush.bf16.xpose.msra.mxu0 0
    %573 = vmatpush.bf16.xpose.msra.mxu0 0
    %574 = vmatpush.bf16.xpose.msra.mxu0 %v565
    %575 = vmatmul.bf16.gmra.mxu0 %v562
    %v576 = vpop.f32.mrf.mxu0
    %v577 = vadd.f32 0.0, %v576
    %v578 = vpop.f32.mrf.mxu0
    %579 = vdwg.mxu0
    %v581 = vsel %vm503, %v483, 0
    %v584 = vsel %vm503, %v491, 0
    %586 = vmatpush.bf16.xpose.msra.mxu0 0
    %587 = vmatpush.bf16.xpose.msra.mxu0 0
    %588 = vmatpush.bf16.xpose.msra.mxu0 0
    %589 = vmatpush.bf16.xpose.msra.mxu0 0
    %590 = vmatpush.bf16.xpose.msra.mxu0 0
    %591 = vmatpush.bf16.xpose.msra.mxu0 0
    %592 = vmatpush.bf16.xpose.msra.mxu0 0
    %593 = vmatpush.bf16.xpose.msra.mxu0 %v584
    %594 = vmatmul.bf16.gmra.mxu0 %v581
    %v595 = vpop.f32.mrf.mxu0
    %v596 = vadd.f32 0.0, %v595
    %v597 = vpop.f32.mrf.mxu0
    %598 = vdwg.mxu0
    %v600 = vsel %vm503, %v484, 0
    %v603 = vsel %vm503, %v492, 0
    %605 = vmatpush.bf16.xpose.msra.mxu0 0
    %606 = vmatpush.bf16.xpose.msra.mxu0 0
    %607 = vmatpush.bf16.xpose.msra.mxu0 0
    %608 = vmatpush.bf16.xpose.msra.mxu0 0
    %609 = vmatpush.bf16.xpose.msra.mxu0 0
    %610 = vmatpush.bf16.xpose.msra.mxu0 0
    %611 = vmatpush.bf16.xpose.msra.mxu0 0
    %612 = vmatpush.bf16.xpose.msra.mxu0 %v603
    %613 = vmatmul.bf16.gmra.mxu0 %v600
    %v614 = vpop.f32.mrf.mxu0
    %v615 = vadd.f32 0.0, %v614
    %v616 = vpop.f32.mrf.mxu0
    %617 = vdwg.mxu0
    %v619 = vsel %vm503, %v485, 0
    %v622 = vsel %vm503, %v493, 0
    %624 = vmatpush.bf16.xpose.msra.mxu0 0
    %625 = vmatpush.bf16.xpose.msra.mxu0 0
    %626 = vmatpush.bf16.xpose.msra.mxu0 0
    %627 = vmatpush.bf16.xpose.msra.mxu0 0
    %628 = vmatpush.bf16.xpose.msra.mxu0 0
    %629 = vmatpush.bf16.xpose.msra.mxu0 0
    %630 = vmatpush.bf16.xpose.msra.mxu0 0
    %631 = vmatpush.bf16.xpose.msra.mxu0 %v622
    %632 = vmatmul.bf16.gmra.mxu0 %v619
    %v633 = vpop.f32.mrf.mxu0
    %v634 = vadd.f32 0.0, %v633
    %v635 = vpop.f32.mrf.mxu0
    %636 = vdwg.mxu0
    %v638 = vsel %vm503, %v486, 0
    %v641 = vsel %vm503, %v494, 0
    %643 = vmatpush.bf16.xpose.msra.mxu0 0
    %644 = vmatpush.bf16.xpose.msra.mxu0 0
    %645 = vmatpush.bf16.xpose.msra.mxu0 0
    %646 = vmatpush.bf16.xpose.msra.mxu0 0
    %647 = vmatpush.bf16.xpose.msra.mxu0 0
    %648 = vmatpush.bf16.xpose.msra.mxu0 0
    %649 = vmatpush.bf16.xpose.msra.mxu0 0
    %650 = vmatpush.bf16.xpose.msra.mxu0 %v641
    %651 = vmatmul.bf16.gmra.mxu0 %v638
    %v652 = vpop.f32.mrf.mxu0
    %v653 = vadd.f32 0.0, %v652
    %v654 = vpop.f32.mrf.mxu0
    %655 = vdwg.mxu0
    %v656 = vsel %vm503, %v520, -inf
    %657 = vmax.xlane.f32.xlu0 %v656
    %v658 = vpop.xlane.xlu0 %657
    %v659 = vsel %vm503, %v539, -inf
    %660 = vmax.xlane.f32.xlu0 %v659
    %v661 = vpop.xlane.xlu0 %660
    %v662 = vsel %vm503, %v558, -inf
    %663 = vmax.xlane.f32.xlu0 %v662
    %v664 = vpop.xlane.xlu0 %663
    %v665 = vsel %vm503, %v577, -inf
    %666 = vmax.xlane.f32.xlu0 %v665
    %v667 = vpop.xlane.xlu0 %666
    %v668 = vsel %vm503, %v596, -inf
    %669 = vmax.xlane.f32.xlu0 %v668
    %v670 = vpop.xlane.xlu0 %669
    %v671 = vsel %vm503, %v615, -inf
    %672 = vmax.xlane.f32.xlu0 %v671
    %v673 = vpop.xlane.xlu0 %672
    %v674 = vsel %vm503, %v634, -inf
    %675 = vmax.xlane.f32.xlu0 %v674
    %v676 = vpop.xlane.xlu0 %675
    %v677 = vsel %vm503, %v653, -inf
    %678 = vmax.xlane.f32.xlu0 %v677
    %v679 = vpop.xlane.xlu0 %678
    %v680 = vsub.f32 %v520, %v658
    %v681 = vsub.f32 %v539, %v661
    %v682 = vsub.f32 %v558, %v664
    %v683 = vsub.f32 %v577, %v667
    %v684 = vsub.f32 %v596, %v670
    %v685 = vsub.f32 %v615, %v673
    %v686 = vsub.f32 %v634, %v676
    %v687 = vsub.f32 %v653, %v679
    %v688 = vmul.f32 %v680, 1.442695
    %v689 = vpow.pop %v688
    %v690 = vmul.f32 %v681, 1.442695
    %v691 = vpow.pop %v690
    %v692 = vmul.f32 %v682, 1.442695
    %v693 = vpow.pop %v692
    %v694 = vmul.f32 %v683, 1.442695
    %v695 = vpow.pop %v694
    %v696 = vmul.f32 %v684, 1.442695
    %v697 = vpow.pop %v696
    %v698 = vmul.f32 %v685, 1.442695
    %v699 = vpow.pop %v698
    %v700 = vmul.f32 %v686, 1.442695
    %v701 = vpow.pop %v700
    %v702 = vmul.f32 %v687, 1.442695
    %v703 = vpow.pop %v702
    %v704 = vsel %vm503, %v689, 0.0
    %705 = vadd.xlane.f32.xlu0 %v704
    %v706 = vpop.xlane.xlu0 %705
    %v707 = vsel %vm503, %v691, 0.0
    %708 = vadd.xlane.f32.xlu0 %v707
    %v709 = vpop.xlane.xlu0 %708
    %v710 = vsel %vm503, %v693, 0.0
    %711 = vadd.xlane.f32.xlu0 %v710
    %v712 = vpop.xlane.xlu0 %711
    %v713 = vsel %vm503, %v695, 0.0
    %714 = vadd.xlane.f32.xlu0 %v713
    %v715 = vpop.xlane.xlu0 %714
    %v716 = vsel %vm503, %v697, 0.0
    %717 = vadd.xlane.f32.xlu0 %v716
    %v718 = vpop.xlane.xlu0 %717
    %v719 = vsel %vm503, %v699, 0.0
    %720 = vadd.xlane.f32.xlu0 %v719
    %v721 = vpop.xlane.xlu0 %720
    %v722 = vsel %vm503, %v701, 0.0
    %723 = vadd.xlane.f32.xlu0 %v722
    %v724 = vpop.xlane.xlu0 %723
    %v725 = vsel %vm503, %v703, 0.0
    %726 = vadd.xlane.f32.xlu0 %v725
    %v727 = vpop.xlane.xlu0 %726
    %v728 = vrcp.pop %v706
    %v729 = vrcp.pop %v709
    %v730 = vrcp.pop %v712
    %v731 = vrcp.pop %v715
    %v732 = vrcp.pop %v718
    %v733 = vrcp.pop %v721
    %v734 = vrcp.pop %v724
    %v735 = vrcp.pop %v727
    %v736 = vmul.f32 %v689, %v728
    %v737 = vmul.f32 %v691, %v729
    %v738 = vmul.f32 %v693, %v730
    %v739 = vmul.f32 %v695, %v731
    %v740 = vmul.f32 %v697, %v732
    %v741 = vmul.f32 %v699, %v733
    %v742 = vmul.f32 %v701, %v734
    %v743 = vmul.f32 %v703, %v735
    %v744 = vpack.c.bf16 %v736, %v736
    %v745 = vpack.c.bf16 %v737, %v737
    %v746 = vpack.c.bf16 %v738, %v738
    %v747 = vpack.c.bf16 %v739, %v739
    %v748 = vpack.c.bf16 %v740, %v740
    %v749 = vpack.c.bf16 %v741, %v741
    %v750 = vpack.c.bf16 %v742, %v742
    %v751 = vpack.c.bf16 %v743, %v743
    %v753 = vsel %vm503, %v744, 0
    %vm755 = vcmask 1043456
    %v757 = vsel %vm755, %v495, 0
    %759 = vmatpush.bf16.msra.mxu0 0
    %760 = vmatpush.bf16.msra.mxu0 0
    %761 = vmatpush.bf16.msra.mxu0 0
    %762 = vmatpush.bf16.msra.mxu0 0
    %763 = vmatpush.bf16.msra.mxu0 0
    %764 = vmatpush.bf16.msra.mxu0 0
    %765 = vmatpush.bf16.msra.mxu0 0
    %766 = vmatpush.bf16.msra.mxu0 %v757
    %767 = vmatmul.bf16.gmra.mxu0 %v753
    %v768 = vpop.f32.mrf.mxu0
    %v769 = vadd.f32 0.0, %v768
    %v770 = vpop.f32.mrf.mxu0
    %771 = vdwg.mxu0
    %v773 = vsel %vm503, %v745, 0
    %v776 = vsel %vm755, %v496, 0
    %778 = vmatpush.bf16.msra.mxu0 0
    %779 = vmatpush.bf16.msra.mxu0 0
    %780 = vmatpush.bf16.msra.mxu0 0
    %781 = vmatpush.bf16.msra.mxu0 0
    %782 = vmatpush.bf16.msra.mxu0 0
    %783 = vmatpush.bf16.msra.mxu0 0
    %784 = vmatpush.bf16.msra.mxu0 0
    %785 = vmatpush.bf16.msra.mxu0 %v776
    %786 = vmatmul.bf16.gmra.mxu0 %v773
    %v787 = vpop.f32.mrf.mxu0
    %v788 = vadd.f32 0.0, %v787
    %v789 = vpop.f32.mrf.mxu0
    %790 = vdwg.mxu0
    %v792 = vsel %vm503, %v746, 0
    %v795 = vsel %vm755, %v497, 0
    %797 = vmatpush.bf16.msra.mxu0 0
    %798 = vmatpush.bf16.msra.mxu0 0
    %799 = vmatpush.bf16.msra.mxu0 0
    %800 = vmatpush.bf16.msra.mxu0 0
    %801 = vmatpush.bf16.msra.mxu0 0
    %802 = vmatpush.bf16.msra.mxu0 0
    %803 = vmatpush.bf16.msra.mxu0 0
    %804 = vmatpush.bf16.msra.mxu0 %v795
    %805 = vmatmul.bf16.gmra.mxu0 %v792
    %v806 = vpop.f32.mrf.mxu0
    %v807 = vadd.f32 0.0, %v806
    %v808 = vpop.f32.mrf.mxu0
    %809 = vdwg.mxu0
    %v811 = vsel %vm503, %v747, 0
    %v814 = vsel %vm755, %v498, 0
    %816 = vmatpush.bf16.msra.mxu0 0
    %817 = vmatpush.bf16.msra.mxu0 0
    %818 = vmatpush.bf16.msra.mxu0 0
    %819 = vmatpush.bf16.msra.mxu0 0
    %820 = vmatpush.bf16.msra.mxu0 0
    %821 = vmatpush.bf16.msra.mxu0 0
    %822 = vmatpush.bf16.msra.mxu0 0
    %823 = vmatpush.bf16.msra.mxu0 %v814
    %824 = vmatmul.bf16.gmra.mxu0 %v811
    %v825 = vpop.f32.mrf.mxu0
    %v826 = vadd.f32 0.0, %v825
    %v827 = vpop.f32.mrf.mxu0
    %828 = vdwg.mxu0
    %v830 = vsel %vm503, %v748, 0
    %v833 = vsel %vm755, %v499, 0
    %835 = vmatpush.bf16.msra.mxu0 0
    %836 = vmatpush.bf16.msra.mxu0 0
    %837 = vmatpush.bf16.msra.mxu0 0
    %838 = vmatpush.bf16.msra.mxu0 0
    %839 = vmatpush.bf16.msra.mxu0 0
    %840 = vmatpush.bf16.msra.mxu0 0
    %841 = vmatpush.bf16.msra.mxu0 0
    %842 = vmatpush.bf16.msra.mxu0 %v833
    %843 = vmatmul.bf16.gmra.mxu0 %v830
    %v844 = vpop.f32.mrf.mxu0
    %v845 = vadd.f32 0.0, %v844
    %v846 = vpop.f32.mrf.mxu0
    %847 = vdwg.mxu0
    %v849 = vsel %vm503, %v749, 0
    %v852 = vsel %vm755, %v500, 0
    %854 = vmatpush.bf16.msra.mxu0 0
    %855 = vmatpush.bf16.msra.mxu0 0
    %856 = vmatpush.bf16.msra.mxu0 0
    %857 = vmatpush.bf16.msra.mxu0 0
    %858 = vmatpush.bf16.msra.mxu0 0
    %859 = vmatpush.bf16.msra.mxu0 0
    %860 = vmatpush.bf16.msra.mxu0 0
    %861 = vmatpush.bf16.msra.mxu0 %v852
    %862 = vmatmul.bf16.gmra.mxu0 %v849
    %v863 = vpop.f32.mrf.mxu0
    %v864 = vadd.f32 0.0, %v863
    %v865 = vpop.f32.mrf.mxu0
    %866 = vdwg.mxu0
    %v868 = vsel %vm503, %v750, 0
    %v871 = vsel %vm755, %v501, 0
    %873 = vmatpush.bf16.msra.mxu0 0
    %874 = vmatpush.bf16.msra.mxu0 0
    %875 = vmatpush.bf16.msra.mxu0 0
    %876 = vmatpush.bf16.msra.mxu0 0
    %877 = vmatpush.bf16.msra.mxu0 0
    %878 = vmatpush.bf16.msra.mxu0 0
    %879 = vmatpush.bf16.msra.mxu0 0
    %880 = vmatpush.bf16.msra.mxu0 %v871
    %881 = vmatmul.bf16.gmra.mxu0 %v868
    %v882 = vpop.f32.mrf.mxu0
    %v883 = vadd.f32 0.0, %v882
    %v884 = vpop.f32.mrf.mxu0
    %885 = vdwg.mxu0
    %v887 = vsel %vm503, %v751, 0
    %v890 = vsel %vm755, %v502, 0
    %892 = vmatpush.bf16.msra.mxu0 0
    %893 = vmatpush.bf16.msra.mxu0 0
    %894 = vmatpush.bf16.msra.mxu0 0
    %895 = vmatpush.bf16.msra.mxu0 0
    %896 = vmatpush.bf16.msra.mxu0 0
    %897 = vmatpush.bf16.msra.mxu0 0
    %898 = vmatpush.bf16.msra.mxu0 0
    %899 = vmatpush.bf16.msra.mxu0 %v890
    %900 = vmatmul.bf16.gmra.mxu0 %v887
    %v901 = vpop.f32.mrf.mxu0
    %v902 = vadd.f32 0.0, %v901
    %v903 = vpop.f32.mrf.mxu0
    %904 = vdwg.mxu0
    %v905 = vpack.c.bf16 %v769, %v769
    %v906 = vpack.c.bf16 %v788, %v788
    %v907 = vpack.c.bf16 %v807, %v807
    %v908 = vpack.c.bf16 %v826, %v826
    %v909 = vpack.c.bf16 %v845, %v845
    %v910 = vpack.c.bf16 %v864, %v864
    %v911 = vpack.c.bf16 %v883, %v883
    %v912 = vpack.c.bf16 %v902, %v902
    %v913 = vld [vmem:[%s4] sm:$0xf]
    %v914 = vld [vmem:[%s4 + $0x4] sm:$0xf]
    %v915 = vld [vmem:[%s4 + $0x8] sm:$0xf]
    %v916 = vld [vmem:[%s4 + $0xc] sm:$0xf]
    %v919 = vunpack.c.l.b16 %v905
    %v920 = vunpack.c.l.b16 %v906
    %v921 = vpack.c.b16 %v920, %v919
    %v923 = vsel %vm503, %v921, 0
    %v926 = vsel %vm755, %v913, 0
    %928 = vmatpush.bf16.msra.mxu0 0
    %929 = vmatpush.bf16.msra.mxu0 0
    %930 = vmatpush.bf16.msra.mxu0 0
    %931 = vmatpush.bf16.msra.mxu0 0
    %932 = vmatpush.bf16.msra.mxu0 0
    %933 = vmatpush.bf16.msra.mxu0 0
    %934 = vmatpush.bf16.msra.mxu0 0
    %935 = vmatpush.bf16.msra.mxu0 %v926
    %936 = vmatmul.bf16.gmra.mxu0 %v923
    %v937 = vpop.f32.mrf.mxu0
    %v938 = vadd.f32 0.0, %v937
    %v939 = vpop.f32.mrf.mxu0
    %v940 = vadd.f32 0.0, %v939
    %941 = vdwg.mxu0
    %v944 = vunpack.c.l.b16 %v907
    %v945 = vunpack.c.l.b16 %v908
    %v946 = vpack.c.b16 %v945, %v944
    %v948 = vsel %vm503, %v946, 0
    %v951 = vsel %vm755, %v914, 0
    %953 = vmatpush.bf16.msra.mxu0 0
    %954 = vmatpush.bf16.msra.mxu0 0
    %955 = vmatpush.bf16.msra.mxu0 0
    %956 = vmatpush.bf16.msra.mxu0 0
    %957 = vmatpush.bf16.msra.mxu0 0
    %958 = vmatpush.bf16.msra.mxu0 0
    %959 = vmatpush.bf16.msra.mxu0 0
    %960 = vmatpush.bf16.msra.mxu0 %v951
    %961 = vmatmul.bf16.gmra.mxu0 %v948
    %v962 = vpop.f32.mrf.mxu0
    %v963 = vadd.f32 0.0, %v962
    %v964 = vpop.f32.mrf.mxu0
    %v965 = vadd.f32 0.0, %v964
    %966 = vdwg.mxu0
    %v969 = vunpack.c.l.b16 %v909
    %v970 = vunpack.c.l.b16 %v910
    %v971 = vpack.c.b16 %v970, %v969
    %v973 = vsel %vm503, %v971, 0
    %v976 = vsel %vm755, %v915, 0
    %978 = vmatpush.bf16.msra.mxu0 0
    %979 = vmatpush.bf16.msra.mxu0 0
    %980 = vmatpush.bf16.msra.mxu0 0
    %981 = vmatpush.bf16.msra.mxu0 0
    %982 = vmatpush.bf16.msra.mxu0 0
    %983 = vmatpush.bf16.msra.mxu0 0
    %984 = vmatpush.bf16.msra.mxu0 0
    %985 = vmatpush.bf16.msra.mxu0 %v976
    %986 = vmatmul.bf16.gmra.mxu0 %v973
    %v987 = vpop.f32.mrf.mxu0
    %v988 = vadd.f32 0.0, %v987
    %v989 = vpop.f32.mrf.mxu0
    %v990 = vadd.f32 0.0, %v989
    %991 = vdwg.mxu0
    %v994 = vunpack.c.l.b16 %v911
    %v995 = vunpack.c.l.b16 %v912
    %v996 = vpack.c.b16 %v995, %v994
    %v998 = vsel %vm503, %v996, 0
    %v1001 = vsel %vm755, %v916, 0
    %1003 = vmatpush.bf16.msra.mxu0 0
    %1004 = vmatpush.bf16.msra.mxu0 0
    %1005 = vmatpush.bf16.msra.mxu0 0
    %1006 = vmatpush.bf16.msra.mxu0 0
    %1007 = vmatpush.bf16.msra.mxu0 0
    %1008 = vmatpush.bf16.msra.mxu0 0
    %1009 = vmatpush.bf16.msra.mxu0 0
    %1010 = vmatpush.bf16.msra.mxu0 %v1001
    %1011 = vmatmul.bf16.gmra.mxu0 %v998
    %v1012 = vpop.f32.mrf.mxu0
    %v1013 = vadd.f32 0.0, %v1012
    %v1014 = vpop.f32.mrf.mxu0
    %v1015 = vadd.f32 0.0, %v1014
    %1016 = vdwg.mxu0
    %v1017 = vsel %vm47, %v938, 0.0
    %v1018 = vsel %vm47, %v963, 0.0
    %v1019 = vadd.f32 %v1017, %v1018
    %v1020 = vsel %vm47, %v988, 0.0
    %v1021 = vadd.f32 %v1019, %v1020
    %v1022 = vsel %vm47, %v1013, 0.0
    %v1023 = vadd.f32 %v1021, %v1022
    %v1024 = vsel %vm47, %v940, 0.0
    %v1025 = vsel %vm47, %v965, 0.0
    %v1026 = vadd.f32 %v1024, %v1025
    %v1027 = vsel %vm47, %v990, 0.0
    %v1028 = vadd.f32 %v1026, %v1027
    %v1029 = vsel %vm47, %v1015, 0.0
    %v1030 = vadd.f32 %v1028, %v1029
    %v1031 = vld [vmem:[%s5] sm:$0x1]
    %v1033 = vperm.slane %v1031, 0
    %v1035 = vadd.f32 %v1023, %v1033
    %v1036 = vadd.f32 %v1030, %v1033
    %v1037 = vadd.f32 %v43, %v1035
    %v1038 = vadd.f32 %v44, %v1036
    %v1039 = vld [vmem:[%s6] sm:$0x1]
    %v1040 = vld [vmem:[%s7] sm:$0x1]
    %v1041 = vsel %vm47, %v1037, 0.0
    %1042 = vadd.xlane.f32.xlu0 %v1041
    %v1043 = vpop.xlane.xlu0 %1042
    %v1044 = vsel %vm47, %v1038, 0.0
    %1045 = vadd.xlane.f32.xlu0 %v1044
    %v1046 = vpop.xlane.xlu0 %1045
    %v1047 = vmul.f32 %v1043, %v60
    %v1048 = vmul.f32 %v1046, %v60
    %v1049 = vsub.f32 %v1037, %v1047
    %v1050 = vsub.f32 %v1038, %v1048
    %v1051 = vmul.f32 %v1049, %v1049
    %v1052 = vmul.f32 %v1050, %v1050
    %v1053 = vsel %vm47, %v1051, 0.0
    %1054 = vadd.xlane.f32.xlu0 %v1053
    %v1055 = vpop.xlane.xlu0 %1054
    %v1056 = vsel %vm47, %v1052, 0.0
    %1057 = vadd.xlane.f32.xlu0 %v1056
    %v1058 = vpop.xlane.xlu0 %1057
    %v1059 = vmul.f32 %v1055, %v60
    %v1060 = vmul.f32 %v1058, %v60
    %v1061 = vadd.f32 %v1059, 1e-05
    %v1062 = vadd.f32 %v1060, 1e-05
    %v1063 = vrsqrt.pop %v1061
    %v1064 = vmul.f32 %v1063, %v1061
    %v1065 = vmul.f32 %v1064, %v1063
    %v1066 = vmul.f32 0.5, %v1065
    %v1067 = vsub.f32 1.5, %v1066
    %v1068 = vmul.f32 %v1063, %v1067
    %vm1069 = vweird.f32 %v1061
    %vm1070 = vweird.f32 %v1063
    %vm1071 = vmor %vm1069, %vm1070
    %v1072 = vsel %vm1071, %v1063, %v1068
    %v1073 = vrsqrt.pop %v1062
    %v1074 = vmul.f32 %v1073, %v1062
    %v1075 = vmul.f32 %v1074, %v1073
    %v1076 = vmul.f32 0.5, %v1075
    %v1077 = vsub.f32 1.5, %v1076
    %v1078 = vmul.f32 %v1073, %v1077
    %vm1079 = vweird.f32 %v1062
    %vm1080 = vweird.f32 %v1073
    %vm1081 = vmor %vm1079, %vm1080
    %v1082 = vsel %vm1081, %v1073, %v1078
    %v1083 = vmul.f32 %v1049, %v1072
    %v1084 = vmul.f32 %v1050, %v1082
    %v1086 = vperm.slane %v1039, 0
    %v1088 = vmul.f32 %v1083, %v1086
    %v1089 = vmul.f32 %v1084, %v1086
    %v1091 = vperm.slane %v1040, 0
    %v1093 = vadd.f32 %v1088, %v1091
    %v1094 = vadd.f32 %v1089, %v1091
    %v1095 = vpack.c.bf16 %v1094, %v1093
    %v1096 = vld [vmem:[%s8] sm:$0xf]
    %v1097 = vld [vmem:[%s8 + $0x4] sm:$0xf]
    %v1098 = vld [vmem:[%s8 + $0x8] sm:$0xf]
    %v1099 = vld [vmem:[%s8 + $0xc] sm:$0xf]
    %v1100 = vld [vmem:[%s9] sm:$0x1]
    %v1102 = vperm.slane %v1100, 0
    %v1108 = vunpack.c.l.b16 %v1096
    %v1109 = vunpack.c.l.b16 %v1097
    %v1110 = vunpack.c.l.b16 %v1098
    %v1111 = vunpack.c.l.b16 %v1099
    %v1112 = vpack.c.b16 %v1109, %v1108
    %v1113 = vpack.c.b16 %v1111, %v1110
    %v1117 = vsel %vm47, %v1095, 0
    %1119 = vmatpush.bf16.msra.mxu0 0
    %1120 = vmatpush.bf16.msra.mxu0 0
    %1121 = vmatpush.bf16.msra.mxu0 0
    %1122 = vmatpush.bf16.msra.mxu0 0
    %1123 = vmatpush.bf16.msra.mxu0 0
    %1124 = vmatpush.bf16.msra.mxu0 0
    %1125 = vmatpush.bf16.msra.mxu0 %v1113
    %1126 = vmatpush.bf16.msra.mxu0 %v1112
    %1127 = vmatmul.bf16.gmra.mxu0 %v1117
    %v1128 = vpop.f32.mrf.mxu0
    %v1129 = vadd.f32 %v1102, %v1128
    %v1130 = vpop.f32.mrf.mxu0
    %v1131 = vadd.f32 %v1102, %v1130
    %1132 = vdwg.mxu0
    %v1133 = vmax.f32 %v1129, 0.0
    %v1134 = vmax.f32 %v1131, 0.0
    %v1135 = vpack.c.bf16 %v1134, %v1133
    %v1136 = vld [vmem:[%s10] sm:$0xf]
    %v1137 = vld [vmem:[%s10 + $0x4] sm:$0xf]
    %v1138 = vld [vmem:[%s10 + $0x8] sm:$0xf]
    %v1139 = vld [vmem:[%s10 + $0xc] sm:$0xf]
    %v1140 = vld [vmem:[%s10 + $0x10] sm:$0xf]
    %v1141 = vld [vmem:[%s10 + $0x14] sm:$0xf]
    %v1142 = vld [vmem:[%s10 + $0x18] sm:$0xf]
    %v1143 = vld [vmem:[%s10 + $0x1c] sm:$0xf]
    %v1144 = vld [vmem:[%s11] sm:$0x1]
    %v1146 = vperm.slane %v1144, 0
    %v1156 = vunpack.c.l.b16 %v1136
    %v1157 = vunpack.c.l.b16 %v1137
    %v1158 = vunpack.c.l.b16 %v1138
    %v1159 = vunpack.c.l.b16 %v1139
    %v1160 = vunpack.c.l.b16 %v1140
    %v1161 = vunpack.c.l.b16 %v1141
    %v1162 = vunpack.c.l.b16 %v1142
    %v1163 = vunpack.c.l.b16 %v1143
    %v1164 = vpack.c.b16 %v1157, %v1156
    %v1165 = vpack.c.b16 %v1159, %v1158
    %v1166 = vpack.c.b16 %v1161, %v1160
    %v1167 = vpack.c.b16 %v1163, %v1162
    %vm1172 = vcmask 523264
    %v1174 = vsel %vm1172, %v1135, 0
    %1176 = vmatpush.bf16.msra.mxu0 0
    %1177 = vmatpush.bf16.msra.mxu0 0
    %1178 = vmatpush.bf16.msra.mxu0 0
    %1179 = vmatpush.bf16.msra.mxu0 0
    %1180 = vmatpush.bf16.msra.mxu0 %v1167
    %1181 = vmatpush.bf16.msra.mxu0 %v1166
    %1182 = vmatpush.bf16.msra.mxu0 %v1165
    %1183 = vmatpush.bf16.msra.mxu0 %v1164
    %1184 = vmatmul.bf16.gmra.mxu0 %v1174
    %v1185 = vpop.f32.mrf.mxu0
    %v1186 = vadd.f32 %v1146, %v1185
    %v1187 = vpop.f32.mrf.mxu0
    %v1188 = vadd.f32 %v1146, %v1187
    %1189 = vdwg.mxu0
    %v1190 = vadd.f32 %v1037, %v1186
    %v1191 = vadd.f32 %v1038, %v1188
    %1192 = vst.msk [vmem:[#allocation2] sm:$0xff] %vm47, %v1190
    %1193 = vst.msk [vmem:[#allocation2 + $0x8] sm:$0xff] %vm47, %v1191
    // Predicated region
    $region50: #{tpu_custom_call.1} parent=1 // pred_check
      _
    $region51: #{tpu_custom_call.1} parent=1 // pred_check_branch
      %1195 = sbr.rel (0) target = $region53
    $region52: #{tpu_custom_call.1} parent=1 // pred_region
      %1197 = vsyncadd [#allocation3], 0
      %s1198 = sshll.u32 [#allocation2], 4
      %s1199 = int_to_ptr.vmem [resolvable:$true] %s1198
      %s1200 = sshll.u32 %s12, 4
      %s1201 = int_to_ptr.hbm [resolvable:$true] %s1200
      %1206 = dma.vmem_to_hbm [thread:$0]  %s1199, 256, %s1201, [#allocation3], 128, 128, 8
    $region53: #{tpu_custom_call.1} parent=1 // pred_fallthru
      _
    // Predicated region
    $region54: #{tpu_custom_call.1} parent=1 // pred_check
      _
    $region55: #{tpu_custom_call.1} parent=1 // pred_check_branch
      %1208 = sbr.rel (0) target = $region57
    $region56: #{tpu_custom_call.1} parent=1 // pred_region
      %1210 = dma.done [#allocation3], 256
    $region57: #{tpu_custom_call.1} parent=1 // pred_fallthru
      _
    %1211 = vsyncpa [#allocation3], 1

</llo_original>
